<compile_context>
chip_gen: v5e
topology: v5e:2x2
jax: 0.10.0
libtpu: 0.0.40
codegen_flags: <defaults>
</compile_context>

<pallas_src>
import functools

import jax
import jax.numpy as jnp
from jax import lax
from jax.experimental import pallas as pl
from jax.experimental.pallas import tpu as pltpu


def qmix_kernel(q_ref, s_ref, w_ref, b2w2_ref, b2b2_ref, out_ref, *,
                n_agents_p1, hidden_dim, state_shape):
    A, H, S = n_agents_p1, hidden_dim, state_shape
    AH = A * H

    s = s_ref[...]                                        # (tb, S)
    # One fused hypernet matmul (hyper_w1 | hyper_b1 | hyper_w2 | hyper_b2[0]).
    # The slab's last row holds the four biases; folding it as a broadcast add
    # keeps K at a clean 32 and avoids materializing an s_aug copy in HBM.
    x = (jnp.dot(s, w_ref[:S, :], preferred_element_type=jnp.float32)
         + w_ref[S:S + 1, :])                             # (tb, C = A*H + 3H)

    w1 = jnp.abs(x[:, :AH])                               # (tb, A*H)  |hyper_w1|
    b1 = x[:, AH:AH + H]                                  # (tb, H)    hyper_b1
    w2 = jnp.abs(x[:, AH + H:AH + 2 * H])                 # (tb, H)    |hyper_w2|
    h2 = jnp.maximum(x[:, AH + 2 * H:AH + 3 * H], 0.0)    # (tb, H)    relu(hyper_b2[0])

    # bmm(q (tb,1,A), w1 (tb,A,H)): q stays (tb, A); each agent contributes a
    # single-lane broadcast multiply (cheap on the VPU, A is tiny & static).
    q = q_ref[...]                                        # (tb, A)
    hidden_pre = b1
    for a in range(A):
        hidden_pre = hidden_pre + q[:, a:a + 1] * w1[:, a * H:(a + 1) * H]

    # ELU (alpha=1); keep the clamp so exp never sees large positives (exp runs
    # on the EUP, the unselected branch is discarded by the select).
    hidden = jnp.where(hidden_pre > 0, hidden_pre,
                       jnp.exp(jnp.minimum(hidden_pre, 0.0)) - 1.0)

    # bmm(hidden (tb,1,H), w2 (tb,H,1)) + (h2 @ b2w2 + b2b2):
    #   per-row sum over H of (hidden*w2 + h2*b2w2^T), done as an NT matmul
    #   ones(1,H) . m(tb,H)^T on the MXU (which has slack) so the result comes
    #   out directly lane-major as (1, tb) -> lane-dense output stores.
    v2 = b2w2_ref[...]                                    # (1, H), broadcast over rows
    m = hidden * w2 + h2 * v2                             # (tb, H)
    ones_row = jnp.ones((1, H), jnp.float32)
    row = lax.dot_general(ones_row, m, (((1,), (1,)), ((), ())),
                          preferred_element_type=jnp.float32)  # (1, tb)
    out_ref[...] = row + b2b2_ref[0, 0]


def pack_hypernet(params):
    """Pack the four state-hypernets into one (S+1, C) slab, C = A*H + 3*H.

    Column layout:
      [0, A*H)        hyper_w1
      [A*H, +H)       hyper_b1
      [+H,  +2H)      hyper_w2
      [+2H, +3H)      hyper_b2[0] (pre-ReLU)
    Last row = biases (folded in-kernel with a broadcast add).
    b2w2 / b2b2 (row-invariant) are returned separately so they don't inflate
    the MXU N extent past 256.
    """
    (w1w, w1b, b1w, b1b, w2w, w2b, b2w1, b2b1, b2w2, b2b2) = params
    top = jnp.concatenate([w1w, b1w, w2w, b2w1], axis=1)           # (S, C)
    bot = jnp.concatenate([w1b, b1b, w2b, b2b1], axis=1)           # (1, C)
    slab = jnp.concatenate([top, bot], axis=0).astype(jnp.float32)  # (S+1, C)
    return slab, b2w2.reshape(1, -1).astype(jnp.float32), b2b2.reshape(1, 1).astype(jnp.float32)


def _round_up(x, m):
    return (x + m - 1) // m * m


def _choose_tile(B):
    # Small batches: one whole-batch tile (kernel is launch/DMA-overhead bound).
    if B <= 1024:
        return B, B
    # Large batches: 256-aligned tile, capped at 2048 rows (safe inside v7x's
    # 64 MiB VMEM with double-buffering), picked so the grid has >= 2 steps
    # (keeps both v7x TensorCores busy); B is padded up to a tile multiple.
    tb = min(2048, _round_up(pl.cdiv(B, 2), 256))
    return tb, _round_up(B, tb)


@functools.partial(jax.jit,
                   static_argnames=("n_agents", "qmix_hidden_dim", "state_shape"))
def qmix_forward(q_values, states, params, *, n_agents, qmix_hidden_dim,
                 state_shape):
    episode_num = q_values.shape[0]
    A = 1 + n_agents
    H = qmix_hidden_dim
    S = state_shape
    C = A * H + 3 * H

    q = q_values.reshape(-1, A).astype(jnp.float32)
    s = states.reshape(-1, S).astype(jnp.float32)
    B = q.shape[0]

    slab, b2w2_row, b2b2 = pack_hypernet(params)

    tb, Bp = _choose_tile(B)
    if Bp != B:
        pad = Bp - B
        q = jnp.pad(q, ((0, pad), (0, 0)))
        s = jnp.pad(s, ((0, pad), (0, 0)))

    kernel = functools.partial(qmix_kernel, n_agents_p1=A, hidden_dim=H,
                               state_shape=S)

    # TODO(synk): optionally cast q/s/slab to bfloat16 on v6e/v7x to halve HBM
    # read traffic at very large B (validate numerics first).
    out = pl.pallas_call(
        kernel,
        out_shape=jax.ShapeDtypeStruct((1, Bp), jnp.float32),
        grid_spec=pltpu.PrefetchScalarGridSpec(
            num_scalar_prefetch=0,
            grid=(Bp // tb,),
            in_specs=[
                pl.BlockSpec((tb, A), lambda i: (i, 0)),      # q, unexpanded
                pl.BlockSpec((tb, S), lambda i: (i, 0)),      # raw states
                pl.BlockSpec((S + 1, C), lambda i: (0, 0)),   # fused hypernet slab
                pl.BlockSpec((1, H), lambda i: (0, 0)),       # b2w2 row
                pl.BlockSpec(memory_space=pltpu.MemorySpace.SMEM),  # b2b2 scalar
            ],
            out_specs=pl.BlockSpec((1, tb), lambda i: (0, i)),  # lane-dense row
        ),
        compiler_params=pltpu.CompilerParams(dimension_semantics=("parallel",)),
    )(q, s, slab, b2w2_row, b2b2)

    return out[0, :B].reshape(episode_num, -1, 1)


def _init_linear(key, in_f, out_f):
    # PyTorch nn.Linear default init: U(-1/sqrt(in), 1/sqrt(in)); stored (in, out).
    kw, kb = jax.random.split(key)
    bound = 1.0 / (in_f ** 0.5)
    w = jax.random.uniform(kw, (in_f, out_f), jnp.float32, -bound, bound)
    b = jax.random.uniform(kb, (1, out_f), jnp.float32, -bound, bound)
    return w, b


def _reference_forward(q_values, states, params, *, n_agents, qmix_hidden_dim,
                       state_shape):
    # Pure-JAX reference mirroring the (unfused) PyTorch forward.
    (w1w, w1b, b1w, b1b, w2w, w2b, b2w1, b2b1, b2w2, b2b2) = params
    episode_num = q_values.shape[0]
    A, H, S = 1 + n_agents, qmix_hidden_dim, state_shape
    q = q_values.reshape(-1, 1, A)
    s = states.reshape(-1, S)
    w1 = jnp.abs(s @ w1w + w1b).reshape(-1, A, H)
    b1 = (s @ b1w + b1b).reshape(-1, 1, H)
    pre = jnp.einsum("bia,bah->bih", q, w1) + b1
    hidden = jnp.where(pre > 0, pre, jnp.exp(jnp.minimum(pre, 0.0)) - 1.0)
    w2 = jnp.abs(s @ w2w + w2b).reshape(-1, H, 1)
    b2 = (jnp.maximum(s @ b2w1 + b2b1, 0.0) @ b2w2 + b2b2).reshape(-1, 1, 1)
    q_total = jnp.einsum("bih,bho->bio", hidden, w2) + b2
    return q_total.reshape(episode_num, -1, 1)


if __name__ == "__main__":
    # Small, deterministic config (two_hyper_layers = False branch).
    n_agents = 3
    state_shape = 32
    qmix_hidden_dim = 32
    episode_num = 2
    episode_len = 8
    A = 1 + n_agents

    root = jax.random.PRNGKey(0)
    keys = jax.random.split(root, 8)

    w1w, w1b = _init_linear(keys[0], state_shape, A * qmix_hidden_dim)   # hyper_w1
    b1w, b1b = _init_linear(keys[1], state_shape, qmix_hidden_dim)       # hyper_b1
    w2w, w2b = _init_linear(keys[2], state_shape, qmix_hidden_dim)       # hyper_w2
    b2w1, b2b1 = _init_linear(keys[3], state_shape, qmix_hidden_dim)     # hyper_b2[0]
    b2w2, b2b2 = _init_linear(keys[4], qmix_hidden_dim, 1)               # hyper_b2[2]
    params = (w1w, w1b, b1w, b1b, w2w, w2b, b2w1, b2b1, b2w2, b2b2)

    q_values = jax.random.normal(keys[5], (episode_num, episode_len, A), jnp.float32)
    states = jax.random.normal(keys[6], (episode_num, episode_len, state_shape),
                               jnp.float32)

    kw = dict(n_agents=n_agents, qmix_hidden_dim=qmix_hidden_dim,
              state_shape=state_shape)

    out = qmix_forward(q_values, states, params, **kw)
    out = jax.block_until_ready(out)

    ref = _reference_forward(q_values, states, params, **kw)
    assert out.shape == (episode_num, episode_len, 1), out.shape
    assert jnp.allclose(out, ref, atol=1e-5, rtol=1e-5), "mismatch vs JAX reference"

    print("KERNEL_OK")
</pallas_src>

<mosaic_0001>
module attributes {stable_mosaic.version = 11 : i64} {
  func.func @qmix_kernel(%arg0: i32, %arg1: memref<16x4xf32, #tpu.memory_space<vmem>>, %arg2: memref<16x32xf32, #tpu.memory_space<vmem>>, %arg3: memref<33x224xf32, #tpu.memory_space<vmem>>, %arg4: memref<1x32xf32, #tpu.memory_space<vmem>>, %arg5: memref<1x1xf32, #tpu.memory_space<smem>>, %arg6: memref<1x16xf32, #tpu.memory_space<vmem>>) attributes {dimension_semantics = [#tpu.dimension_semantics<parallel>], iteration_bounds = array<i64: 1>, scalar_prefetch = 0 : i64, scratch_operands = 0 : i64, tpu.core_type = #tpu.core_type<tc>, window_params = [{transform_indices = @transform_0, window_bounds = array<i64: 16, 4>}, {transform_indices = @transform_1, window_bounds = array<i64: 16, 32>}, {pipeline_mode = #tpu.pipeline_mode<synchronous>, transform_indices = @transform_2, window_bounds = array<i64: 33, 224>}, {pipeline_mode = #tpu.pipeline_mode<synchronous>, transform_indices = @transform_3, window_bounds = array<i64: 1, 32>}, {transform_indices = @transform_4, window_bounds = array<i64: 1, 1>}, {transform_indices = @transform_5, window_bounds = array<i64: 1, 16>}]} {
    %c0 = arith.constant 0 : index
    %c0_0 = arith.constant 0 : index
    %0 = vector.load %arg2[%c0, %c0_0] : memref<16x32xf32, #tpu.memory_space<vmem>>, vector<16x32xf32>
    %c0_1 = arith.constant 0 : index
    %c0_2 = arith.constant 0 : index
    %1 = vector.load %arg3[%c0_1, %c0_2] : memref<33x224xf32, #tpu.memory_space<vmem>>, vector<32x224xf32>
    %cst = arith.constant dense<0.000000e+00> : vector<16x224xf32>
    %2 = tpu.matmul %0, %1, %cst {dimension_numbers = #tpu.dot_dimension_numbers<[1], [0], [0], [1], [0, 0, 1, 1], [], []>} : vector<16x32xf32>, vector<32x224xf32>, vector<16x224xf32> -> vector<16x224xf32>
    %c32 = arith.constant 32 : index
    %c0_3 = arith.constant 0 : index
    %3 = vector.load %arg3[%c32, %c0_3] : memref<33x224xf32, #tpu.memory_space<vmem>>, vector<1x224xf32>
    %4 = vector.broadcast %3 : vector<1x224xf32> to vector<16x224xf32>
    %5 = arith.addf %2, %4 : vector<16x224xf32>
    %6 = vector.extract_strided_slice %5 {offsets = [0, 0], sizes = [16, 128], strides = [1, 1]} : vector<16x224xf32> to vector<16x128xf32>
    %7 = math.absf %6 : vector<16x128xf32>
    %8 = vector.extract_strided_slice %5 {offsets = [0, 128], sizes = [16, 32], strides = [1, 1]} : vector<16x224xf32> to vector<16x32xf32>
    %9 = vector.extract_strided_slice %5 {offsets = [0, 160], sizes = [16, 32], strides = [1, 1]} : vector<16x224xf32> to vector<16x32xf32>
    %10 = math.absf %9 : vector<16x32xf32>
    %11 = vector.extract_strided_slice %5 {offsets = [0, 192], sizes = [16, 32], strides = [1, 1]} : vector<16x224xf32> to vector<16x32xf32>
    %cst_4 = arith.constant 0.000000e+00 : f32
    %12 = vector.broadcast %cst_4 : f32 to vector<16x32xf32>
    %13 = arith.maximumf %11, %12 : vector<16x32xf32>
    %c0_5 = arith.constant 0 : index
    %c0_6 = arith.constant 0 : index
    %14 = vector.load %arg1[%c0_5, %c0_6] : memref<16x4xf32, #tpu.memory_space<vmem>>, vector<16x4xf32>
    %15 = vector.extract_strided_slice %14 {offsets = [0, 0], sizes = [16, 1], strides = [1, 1]} : vector<16x4xf32> to vector<16x1xf32>
    %16 = vector.extract_strided_slice %7 {offsets = [0, 0], sizes = [16, 32], strides = [1, 1]} : vector<16x128xf32> to vector<16x32xf32>
    %17 = vector.broadcast %15 : vector<16x1xf32> to vector<16x32xf32>
    %18 = arith.mulf %17, %16 : vector<16x32xf32>
    %19 = arith.addf %8, %18 : vector<16x32xf32>
    %20 = vector.extract_strided_slice %14 {offsets = [0, 1], sizes = [16, 1], strides = [1, 1]} : vector<16x4xf32> to vector<16x1xf32>
    %21 = vector.extract_strided_slice %7 {offsets = [0, 32], sizes = [16, 32], strides = [1, 1]} : vector<16x128xf32> to vector<16x32xf32>
    %22 = vector.broadcast %20 : vector<16x1xf32> to vector<16x32xf32>
    %23 = arith.mulf %22, %21 : vector<16x32xf32>
    %24 = arith.addf %19, %23 : vector<16x32xf32>
    %25 = vector.extract_strided_slice %14 {offsets = [0, 2], sizes = [16, 1], strides = [1, 1]} : vector<16x4xf32> to vector<16x1xf32>
    %26 = vector.extract_strided_slice %7 {offsets = [0, 64], sizes = [16, 32], strides = [1, 1]} : vector<16x128xf32> to vector<16x32xf32>
    %27 = vector.broadcast %25 : vector<16x1xf32> to vector<16x32xf32>
    %28 = arith.mulf %27, %26 : vector<16x32xf32>
    %29 = arith.addf %24, %28 : vector<16x32xf32>
    %30 = vector.extract_strided_slice %14 {offsets = [0, 3], sizes = [16, 1], strides = [1, 1]} : vector<16x4xf32> to vector<16x1xf32>
    %31 = vector.extract_strided_slice %7 {offsets = [0, 96], sizes = [16, 32], strides = [1, 1]} : vector<16x128xf32> to vector<16x32xf32>
    %32 = vector.broadcast %30 : vector<16x1xf32> to vector<16x32xf32>
    %33 = arith.mulf %32, %31 : vector<16x32xf32>
    %34 = arith.addf %29, %33 : vector<16x32xf32>
    %cst_7 = arith.constant 0.000000e+00 : f32
    %35 = vector.broadcast %cst_7 : f32 to vector<16x32xf32>
    %36 = arith.cmpf ogt, %34, %35 : vector<16x32xf32>
    %cst_8 = arith.constant 0.000000e+00 : f32
    %37 = vector.broadcast %cst_8 : f32 to vector<16x32xf32>
    %38 = arith.minimumf %34, %37 : vector<16x32xf32>
    %39 = math.exp %38 : vector<16x32xf32>
    %cst_9 = arith.constant 1.000000e+00 : f32
    %40 = vector.broadcast %cst_9 : f32 to vector<16x32xf32>
    %41 = arith.subf %39, %40 : vector<16x32xf32>
    %42 = arith.select %36, %34, %41 : vector<16x32xi1>, vector<16x32xf32>
    %c0_10 = arith.constant 0 : index
    %c0_11 = arith.constant 0 : index
    %43 = vector.load %arg4[%c0_10, %c0_11] : memref<1x32xf32, #tpu.memory_space<vmem>>, vector<1x32xf32>
    %44 = arith.mulf %42, %10 : vector<16x32xf32>
    %45 = vector.broadcast %43 : vector<1x32xf32> to vector<16x32xf32>
    %46 = arith.mulf %13, %45 : vector<16x32xf32>
    %47 = arith.addf %44, %46 : vector<16x32xf32>
    %cst_12 = arith.constant 1.000000e+00 : f32
    %48 = vector.broadcast %cst_12 : f32 to vector<1x32xf32>
    %cst_13 = arith.constant dense<0.000000e+00> : vector<1x16xf32>
    %49 = tpu.matmul %48, %47, %cst_13 {dimension_numbers = #tpu.dot_dimension_numbers<[1], [1], [0], [0], [0, 0, 1, 0], [], []>} : vector<1x32xf32>, vector<16x32xf32>, vector<1x16xf32> -> vector<1x16xf32>
    %c0_14 = arith.constant 0 : index
    %c0_15 = arith.constant 0 : index
    %50 = memref.load %arg5[%c0_14, %c0_15] : memref<1x1xf32, #tpu.memory_space<smem>>
    %51 = vector.broadcast %50 : f32 to vector<1x16xf32>
    %52 = arith.addf %49, %51 : vector<1x16xf32>
    %c0_16 = arith.constant 0 : index
    %c0_17 = arith.constant 0 : index
    %53 = vector.load %arg6[%c0_16, %c0_17] : memref<1x16xf32, #tpu.memory_space<vmem>>, vector<1x16xf32>
    tpu.vector_store %arg6[%c0_16, %c0_17], %52 {strides = array<i32>} : memref<1x16xf32, #tpu.memory_space<vmem>>, vector<1x16xf32>,
    return
  }
  func.func @transform_0(%arg0: i32) -> (i32, i32) {
    %c0_i32 = arith.constant 0 : i32
    %c0_i32_0 = arith.constant 0 : i32
    return %arg0, %c0_i32 : i32, i32
  }
  func.func @transform_1(%arg0: i32) -> (i32, i32) {
    %c0_i32 = arith.constant 0 : i32
    %c0_i32_0 = arith.constant 0 : i32
    return %arg0, %c0_i32 : i32, i32
  }
  func.func @transform_2(%arg0: i32) -> (i32, i32) {
    %c0_i32 = arith.constant 0 : i32
    %c0_i32_0 = arith.constant 0 : i32
    %c0_i32_1 = arith.constant 0 : i32
    return %c0_i32, %c0_i32_0 : i32, i32
  }
  func.func @transform_3(%arg0: i32) -> (i32, i32) {
    %c0_i32 = arith.constant 0 : i32
    %c0_i32_0 = arith.constant 0 : i32
    %c0_i32_1 = arith.constant 0 : i32
    return %c0_i32, %c0_i32_0 : i32, i32
  }
  func.func @transform_4(%arg0: i32) -> (i32, i32) {
    %c0_i32 = arith.constant 0 : i32
    %c0_i32_0 = arith.constant 0 : i32
    %c0_i32_1 = arith.constant 0 : i32
    return %c0_i32, %c0_i32_0 : i32, i32
  }
  func.func @transform_5(%arg0: i32) -> (i32, i32) {
    %c0_i32 = arith.constant 0 : i32
    %c0_i32_0 = arith.constant 0 : i32
    return %c0_i32, %arg0 : i32, i32
  }
}

</mosaic_0001>

<llo_original>
// kernel: squeeze.1
$region0: #{squeeze.1}
  %s0 = inlined_call_operand.vmem [shape: f32[16], index: 0, kind: input, shape index: {}]
  %s1 = inlined_call_operand.hbm [shape: f32[2,8,1], index: 1, kind: output, shape index: {}]
  $region1: #{squeeze.1} parent=0
    #allocation0 [shape = 'u8[1024]{0}', space=vmem, size = 0x400, scoped, tag = 'operand span for operand 1']
    #allocation1 [shape = 's32[1]{0}', space=sflag, size = 0x4, scoped, tag = 'scoped memory for squeeze.1']
    #allocation2 [shape = 'u8[4096]{0}', space=vmem, size = 0x1000, scoped, tag = 'scoped mem for output reshape']
    #allocation3 [shape = 'u8[4096]{0}', space=vmem, size = 0x1000, scoped, tag = 'scoped mem for input reshape']
    %2 = vsyncpa [#allocation1], 0
    %s4 = ssub.s32 2, 1
    %v5 = vld [vmem:[%s0] sm:%s4]
    %6 = vst [vmem:[#allocation3] sm:%s4] %v5
    %v7 = vld [vmem:[#allocation3] sm:$0x1]
    %vm8 = vcmask 64512
    %9 = vst.msk [vmem:[#allocation2] sm:$0x1] %vm8, %v7
    %v10 = vld [vmem:[#allocation3] sm:$0x1]
    %11 = vrot.lane.b32.xlu0 %v10, 120
    %v12 = vpop.permute.xlu0 %11
    %vm13 = vcmask 64512
    %s14 = scalar_lea.vmem [#allocation2], 1
    %15 = vst.msk [vmem:[%s14] sm:$0x1] %vm13, %v12
    %s17 = ssub.s32 4, 1
    %v18 = vld [vmem:[#allocation2] sm:%s17]
    %s20 = ssub.s32 4, 1
    %21 = vst [vmem:[#allocation0] sm:%s20] %v18
    %23 = vsyncadd [#allocation1], 0
    %s25 = sshll.u32 [#allocation0], 4
    %s26 = int_to_ptr.vmem [resolvable:$true] %s25
    %s27 = sshll.u32 %s1, 4
    %s28 = int_to_ptr.hbm [resolvable:$true] %s27
    %30 = dma.vmem_to_hbm [thread:$0]  %s26, 32, %s28, [#allocation1]
    %32 = dma.done [#allocation1], 32
    %33 = vsyncpa [#allocation1], 1

// kernel: qmix_forward.1
$region0: #{qmix_forward.1}
  #allocation0 [shape = 'u32[]', space=smem, size = 0x4, offset = 0x4, fixed_abs, tag = 'smem constant byte address 0x4 - core index']
  #allocation1 [shape = 'u32[72,128]{1,0:T(1,128)}', space=vmem, size = 0x9000, scoped, tag = 'internal scratch']
  #allocation2 [shape = 'f32[1,1]{1,0:T(1,128)S(6)}', space=smem, size = 0x200, scoped, tag = 'scoped memory for qmix_forward.1']
  %s0 = inlined_call_operand.vmem [shape: f32[16,4], index: 0, kind: input, shape index: {}]
  %s1 = inlined_call_operand.vmem [shape: f32[16,32], index: 1, kind: input, shape index: {}]
  %s2 = inlined_call_operand.vmem [shape: f32[33,224], index: 2, kind: input, shape index: {}]
  %s3 = inlined_call_operand.vmem [shape: f32[1,32], index: 3, kind: input, shape index: {}]
  %s4 = inlined_call_operand.<no memory space> [shape: f32[1,1], index: 4, kind: input, shape index: {}]
  %s5 = inlined_call_operand.vmem [shape: f32[1,16], index: 5, kind: output, shape index: {}]
  %s6 = sld [smem:[#allocation0]]
  $region30: #{qmix_forward.1} parent=0
    _
  %s8 = ssub.s32 1, %s6
  %s9 = scalar_select 0, %s8, %s6
  %10 = sst [smem:[#allocation2]] %s4
  // Predicated region
  $region2: #{qmix_forward.1} parent=0 // pred_check
    _
  $region3: #{qmix_forward.1} parent=0 // pred_check_branch
    %12 = sbr.rel (0) target = $region5
  $region4: #{qmix_forward.1} parent=0 // pred_region
    _
  $region5: #{qmix_forward.1} parent=0 // pred_fallthru
    _
  // Predicated region
  $region6: #{qmix_forward.1} parent=0 // pred_check
    _
  $region7: #{qmix_forward.1} parent=0 // pred_check_branch
    %14 = sbr.rel (0) target = $region9
  $region8: #{qmix_forward.1} parent=0 // pred_region
    _
  $region9: #{qmix_forward.1} parent=0 // pred_fallthru
    _
  // Predicated region
  $region10: #{qmix_forward.1} parent=0 // pred_check
    _
  $region11: #{qmix_forward.1} parent=0 // pred_check_branch
    %16 = sbr.rel (0) target = $region13
  $region12: #{qmix_forward.1} parent=0 // pred_region
    _
  $region13: #{qmix_forward.1} parent=0 // pred_fallthru
    _
  // Predicated region
  $region14: #{qmix_forward.1} parent=0 // pred_check
    _
  $region15: #{qmix_forward.1} parent=0 // pred_check_branch
    %18 = sbr.rel (0) target = $region17
  $region16: #{qmix_forward.1} parent=0 // pred_region
    _
  $region17: #{qmix_forward.1} parent=0 // pred_fallthru
    _
  // Predicated region
  $region18: #{qmix_forward.1} parent=0 // pred_check
    _
  $region19: #{qmix_forward.1} parent=0 // pred_check_branch
    %20 = sbr.rel (0) target = $region21
  $region20: #{qmix_forward.1} parent=0 // pred_region
    _
  $region21: #{qmix_forward.1} parent=0 // pred_fallthru
    _
  %v21 = vld [vmem:[%s1] sm:$0xff]
  %v22 = vld [vmem:[%s1 + $0x8] sm:$0xff]
  %v23 = vld [vmem:[%s2] sm:$0xff]
  %v24 = vld [vmem:[%s2 + $0x8] sm:$0xff]
  %v25 = vld [vmem:[%s2 + $0x10] sm:$0xff]
  %v26 = vld [vmem:[%s2 + $0x18] sm:$0xff]
  %v27 = vld [vmem:[%s2 + $0x20] sm:$0xff]
  %v28 = vld [vmem:[%s2 + $0x28] sm:$0xff]
  %v29 = vld [vmem:[%s2 + $0x30] sm:$0xff]
  %v30 = vld [vmem:[%s2 + $0x38] sm:$0xff]
  %s31 = scalar_lea.vmem %s2, 64
  %v32 = vld [vmem:[%s31] ss:$8 sm:$0x3]
  %v34 = vperm.slane %v32, 0
  %v35 = vperm.slane %v32, 1
  %vm38 = vcmask 261120
  %v40 = vsel %vm38, %v21, 0
  %v43 = vsel %vm38, %v22, 0
  %45 = vmatpush.msra.mxu0 0.0
  %46 = vmatpush.msra.mxu0 0.0
  %47 = vmatpush.msra.mxu0 0.0
  %48 = vmatpush.msra.mxu0 0.0
  %49 = vmatpush.msra.mxu0 0.0
  %50 = vmatpush.msra.mxu0 0.0
  %51 = vmatpush.msra.mxu0 0.0
  %52 = vmatpush.msra.mxu0 0.0
  %53 = vmatpush.msra.mxu0 0.0
  %54 = vmatpush.msra.mxu0 0.0
  %55 = vmatpush.msra.mxu0 0.0
  %56 = vmatpush.msra.mxu0 0.0
  %57 = vmatpush.msra.mxu0 %v29
  %58 = vmatpush.msra.mxu0 %v27
  %59 = vmatpush.msra.mxu0 %v25
  %60 = vmatpush.msra.mxu0 %v23
  %61 = vmatmul.f32.gmra.mxu0 %v40
  %v62 = vpop.f32.mrf.mxu0
  %v63 = vadd.f32 %v34, %v62
  %64 = vmatmul.f32.gmra.mxu0 %v43
  %v65 = vpop.f32.mrf.mxu0
  %v66 = vadd.f32 %v34, %v65
  %67 = vdwg.mxu0
  %68 = vmatpush.msra.mxu0 0.0
  %69 = vmatpush.msra.mxu0 0.0
  %70 = vmatpush.msra.mxu0 0.0
  %71 = vmatpush.msra.mxu0 0.0
  %72 = vmatpush.msra.mxu0 0.0
  %73 = vmatpush.msra.mxu0 0.0
  %74 = vmatpush.msra.mxu0 0.0
  %75 = vmatpush.msra.mxu0 0.0
  %76 = vmatpush.msra.mxu0 0.0
  %77 = vmatpush.msra.mxu0 0.0
  %78 = vmatpush.msra.mxu0 0.0
  %79 = vmatpush.msra.mxu0 0.0
  %80 = vmatpush.msra.mxu0 %v30
  %81 = vmatpush.msra.mxu0 %v28
  %82 = vmatpush.msra.mxu0 %v26
  %83 = vmatpush.msra.mxu0 %v24
  %84 = vmatmul.f32.gmra.mxu0 %v40
  %v85 = vpop.f32.mrf.mxu0
  %v86 = vadd.f32 %v35, %v85
  %87 = vmatmul.f32.gmra.mxu0 %v43
  %v88 = vpop.f32.mrf.mxu0
  %v89 = vadd.f32 %v35, %v88
  %90 = vdwg.mxu0
  %v91 = vand.u32 2147483647, %v63
  %v92 = vand.u32 2147483647, %v66
  %v93 = vand.u32 2147483647, %v86
  %v94 = vand.u32 2147483647, %v89
  %v95 = vmax.f32 %v86, 0.0
  %v96 = vmax.f32 %v89, 0.0
  %v97 = vld [vmem:[%s0] sm:$0xff]
  %v98 = vld [vmem:[%s0 + $0x8] sm:$0xff]
  %100 = vset.pattern.permute.xlu0 0
  %101 = vperm.xlu0 %100, %v97
  %v102 = vpop.permute.xlu0 %101
  %105 = vset.pattern.permute.xlu0 0
  %106 = vperm.xlu0 %105, %v98
  %v107 = vpop.permute.xlu0 %106
  %v109 = vmul.f32 %v102, %v91
  %v110 = vmul.f32 %v107, %v92
  %v111 = vadd.f32 %v86, %v109
  %v112 = vadd.f32 %v89, %v110
  %113 = vset.pattern.permute.xlu0 1
  %114 = vperm.xlu0 %113, %v97
  %v115 = vpop.permute.xlu0 %114
  %117 = vset.pattern.permute.xlu0 1
  %118 = vperm.xlu0 %117, %v98
  %v119 = vpop.permute.xlu0 %118
  %v121 = vmul.f32 %v115, %v91
  %v122 = vmul.f32 %v119, %v92
  %125 = vrot.lane.b32.xlu0 %v121, 96
  %v126 = vpop.permute.xlu0 %125
  %127 = vrot.lane.b32.xlu0 %v122, 96
  %v128 = vpop.permute.xlu0 %127
  %v131 = vadd.f32 %v111, %v126
  %v132 = vadd.f32 %v112, %v128
  %133 = vset.pattern.permute.xlu0 2
  %134 = vperm.xlu0 %133, %v97
  %v135 = vpop.permute.xlu0 %134
  %137 = vset.pattern.permute.xlu0 2
  %138 = vperm.xlu0 %137, %v98
  %v139 = vpop.permute.xlu0 %138
  %v141 = vmul.f32 %v135, %v91
  %v142 = vmul.f32 %v139, %v92
  %145 = vrot.lane.b32.xlu0 %v141, 64
  %v146 = vpop.permute.xlu0 %145
  %147 = vrot.lane.b32.xlu0 %v142, 64
  %v148 = vpop.permute.xlu0 %147
  %v151 = vadd.f32 %v131, %v146
  %v152 = vadd.f32 %v132, %v148
  %153 = vset.pattern.permute.xlu0 3
  %154 = vperm.xlu0 %153, %v97
  %v155 = vpop.permute.xlu0 %154
  %157 = vset.pattern.permute.xlu0 3
  %158 = vperm.xlu0 %157, %v98
  %v159 = vpop.permute.xlu0 %158
  %v161 = vmul.f32 %v155, %v91
  %v162 = vmul.f32 %v159, %v92
  %165 = vrot.lane.b32.xlu0 %v161, 32
  %v166 = vpop.permute.xlu0 %165
  %167 = vrot.lane.b32.xlu0 %v162, 32
  %v168 = vpop.permute.xlu0 %167
  %v171 = vadd.f32 %v151, %v166
  %v172 = vadd.f32 %v152, %v168
  %vm173 = vcmp.gt.f32.partialorder %v171, 0.0
  %vm174 = vcmp.gt.f32.partialorder %v172, 0.0
  %v175 = vmin.f32 %v171, 0.0
  %v176 = vmin.f32 %v172, 0.0
  %v177 = vmul.f32 %v175, 1.442695
  %v178 = vpow.pop %v177
  %v179 = vmul.f32 %v176, 1.442695
  %v180 = vpow.pop %v179
  %v181 = vsub.f32 %v178, 1.0
  %v182 = vsub.f32 %v180, 1.0
  %v183 = vsel %vm173, %v171, %v181
  %v184 = vsel %vm174, %v172, %v182
  %v185 = vld [vmem:[%s3] sm:$0x1]
  %188 = vrot.lane.b32.xlu0 %v93, 96
  %v189 = vpop.permute.xlu0 %188
  %190 = vrot.lane.b32.xlu0 %v94, 96
  %v191 = vpop.permute.xlu0 %190
  %v194 = vmul.f32 %v183, %v189
  %v195 = vmul.f32 %v184, %v191
  %v197 = vperm.slane %v185, 0
  %198 = vrot.lane.b32.xlu0 %v197, 64
  %v199 = vpop.permute.xlu0 %198
  %v201 = vmul.f32 %v95, %v199
  %v202 = vmul.f32 %v96, %v199
  %205 = vrot.lane.b32.xlu0 %v201, 64
  %v206 = vpop.permute.xlu0 %205
  %207 = vrot.lane.b32.xlu0 %v202, 64
  %v208 = vpop.permute.xlu0 %207
  %v211 = vadd.f32 %v194, %v206
  %v212 = vadd.f32 %v195, %v208
  %s213 = sld [smem:[#allocation2]]
  %v214 = vstv %s213
  %v216 = vsel %vm38, 1.0, 0
  %v219 = vsel %vm38, %v211, 0
  %v222 = vsel %vm38, %v212, 0
  %224 = vmatpush.xpose.msra.mxu0 0.0
  %225 = vmatpush.xpose.msra.mxu0 0.0
  %226 = vmatpush.xpose.msra.mxu0 0.0
  %227 = vmatpush.xpose.msra.mxu0 0.0
  %228 = vmatpush.xpose.msra.mxu0 0.0
  %229 = vmatpush.xpose.msra.mxu0 0.0
  %230 = vmatpush.xpose.msra.mxu0 0.0
  %231 = vmatpush.xpose.msra.mxu0 0.0
  %232 = vmatpush.xpose.msra.mxu0 0.0
  %233 = vmatpush.xpose.msra.mxu0 0.0
  %234 = vmatpush.xpose.msra.mxu0 0.0
  %235 = vmatpush.xpose.msra.mxu0 0.0
  %236 = vmatpush.xpose.msra.mxu0 0.0
  %237 = vmatpush.xpose.msra.mxu0 0.0
  %238 = vmatpush.xpose.msra.mxu0 %v222
  %239 = vmatpush.xpose.msra.mxu0 %v219
  %240 = vmatmul.f32.gmra.mxu0 %v216
  %v241 = vpop.f32.mrf.mxu0
  %v242 = vadd.f32 %v214, %v241
  %243 = vdwg.mxu0
  %vm244 = vcmask 122880
  %245 = vst.msk [vmem:[%s5] sm:$0x1] %vm244, %v242
  // Predicated region
  $region22: #{qmix_forward.1} parent=0 // pred_check
    _
  $region23: #{qmix_forward.1} parent=0 // pred_check_branch
    %247 = sbr.rel (0) target = $region25
  $region24: #{qmix_forward.1} parent=0 // pred_region
    _
  $region25: #{qmix_forward.1} parent=0 // pred_fallthru
    _
  // Predicated region
  $region26: #{qmix_forward.1} parent=0 // pred_check
    _
  $region27: #{qmix_forward.1} parent=0 // pred_check_branch
    %249 = sbr.rel (0) target = $region29
  $region28: #{qmix_forward.1} parent=0 // pred_region
    _
  $region29: #{qmix_forward.1} parent=0 // pred_fallthru
    _

</llo_original>
